<compile_context>
chip_gen: v5e
topology: v5e:2x2
jax: 0.10.0
libtpu: 0.0.40
codegen_flags: <defaults>
</compile_context>

<pallas_src>
import jax
import jax.numpy as jnp
from jax.experimental import pallas as pl
from jax.experimental.pallas import tpu as pltpu


def _round_up(x, m):
    return (x + m - 1) // m * m


def autoencoder_kernel(x_ref, w1_ref, b1_ref, w2_ref, b2_ref, o_ref, h_ref):
    # Encoder: runs once per batch tile (j == 0); cached in VMEM scratch.
    @pl.when(pl.program_id(1) == 0)
    def _():
        h = jnp.dot(x_ref[...], w1_ref[...], preferred_element_type=jnp.float32)
        h = jnp.maximum(h + b1_ref[...], 0.0)          # f32 epilogue (v5e-safe)
        h_ref[...] = h.astype(h_ref.dtype)             # bf16 cache, ready for MXU

    # Decoder: one output-column tile per j.
    y = jnp.dot(h_ref[...], w2_ref[...], preferred_element_type=jnp.float32)
    y = jnp.maximum(y + b2_ref[...], 0.0)
    o_ref[...] = y.astype(o_ref.dtype)                 # lane-dense store (tn % 128 == 0)


def _vmem_limit_bytes():
    cap = None
    try:
        cap = int(pltpu.get_tpu_info().vmem_capacity_bytes)
    except Exception:
        cap = None
    if cap is None:
        cap = 128 * 1024 * 1024
    if cap <= 64 * 1024 * 1024:
        # v7x: 64 MiB physical per TensorCore -> leave headroom for Mosaic scratch.
        return 48 * 1024 * 1024
    # v5e / v6e: 128 MiB physical -> keep ~16 MiB headroom.
    return min(cap - 16 * 1024 * 1024, 112 * 1024 * 1024)


def _pick_block_b(B):
    if B >= 1024:
        return 512        # fewer grid steps, closer to HBM roofline (v5e/v6e)
    if B >= 512:
        return 256        # keep >= 2 grid steps so v7x shards across both TCs
    if B >= 256:
        return 128
    return _round_up(B, 16)   # bf16 packs 16 sublanes per vreg


def _pick_tn(Dp):
    n = Dp // 128
    for cand in (4, 3, 2):
        if n % cand == 0:
            return cand * 128
    return 128


def prepare_params(w1, b1, w2, b2, *, matmul_dtype=jnp.bfloat16):
    """Pad to lane-dense (multiple-of-128) dims and cast weights once.

    w1: [D_in, H]; b1: [1, H]; w2: [H, D_in]; b2: [1, D_in].
    Cache the returned dict across forward calls.
    """
    D_in, H = w1.shape
    Dp = _round_up(D_in, 128)
    Hp = _round_up(H, 128)

    def pad2(a, rows, cols):
        pr, pc = rows - a.shape[0], cols - a.shape[1]
        return a if (pr == 0 and pc == 0) else jnp.pad(a, ((0, pr), (0, pc)))

    f32 = jnp.float32
    return dict(
        w1=pad2(w1.astype(f32), Dp, Hp).astype(matmul_dtype),
        b1=pad2(b1.astype(f32), 1, Hp),
        w2=pad2(w2.astype(f32), Hp, Dp).astype(matmul_dtype),
        b2=pad2(b2.astype(f32), 1, Dp),
        d_in=D_in, hidden=H, dp=Dp, hp=Hp, matmul_dtype=matmul_dtype,
    )


def autoencoder_forward(x, params, *, block_b=None, out_dtype=None):
    """x: [B, D_in] float; params from prepare_params(). Returns [B, D_in]."""
    B, D_in = x.shape
    assert D_in == params["d_in"], "x feature dim must match prepared params"
    Dp, Hp = params["dp"], params["hp"]
    matmul_dtype = params["matmul_dtype"]
    out_dtype = x.dtype if out_dtype is None else out_dtype

    if block_b is None:
        block_b = _pick_block_b(B)
    Bp = _round_up(B, block_b)

    # Pad x only when needed (avoid a no-op pad's full HBM copy).
    xp = x
    if (Bp - B) or (Dp - D_in):
        xp = jnp.pad(x, ((0, Bp - B), (0, Dp - D_in)))
    xp = xp.astype(matmul_dtype)

    tn = _pick_tn(Dp)
    grid = (Bp // block_b, Dp // tn)

    # TODO(synk): when Dp*Hp weights (even single-buffered) exceed the VMEM
    # budget, additionally tile W1's K dim (Dp) with an f32 accumulator scratch
    # for the encoder instead of a full-extent (Dp, Hp) resident block.

    flops = 4 * Bp * Dp * Hp   # 2*B*Dp*Hp per layer
    bytes_accessed = (
        Bp * Dp * jnp.dtype(matmul_dtype).itemsize        # x
        + 2 * Dp * Hp * jnp.dtype(matmul_dtype).itemsize  # W1 + W2
        + (Hp + Dp) * 4                                   # biases (f32)
        + Bp * Dp * jnp.dtype(out_dtype).itemsize         # output
    )
    cost = pl.CostEstimate(flops=flops, transcendentals=0,
                           bytes_accessed=bytes_accessed)

    def run(weight_buffers):
        def wspec(shape, index_map):
            # Grid-invariant blocks: single-buffer to halve their VMEM footprint.
            if weight_buffers is None:
                return pl.BlockSpec(shape, index_map)
            return pl.BlockSpec(shape, index_map,
                                pipeline_mode=pl.Buffered(weight_buffers))

        return pl.pallas_call(
            autoencoder_kernel,
            out_shape=jax.ShapeDtypeStruct((Bp, Dp), out_dtype),
            grid=grid,
            in_specs=[
                pl.BlockSpec((block_b, Dp), lambda i, j: (i, 0)),   # x: walks batch, resident across j
                wspec((Dp, Hp), lambda i, j: (0, 0)),               # W1: grid-invariant, 1 buffer
                wspec((1, Hp), lambda i, j: (0, 0)),                # b1: grid-invariant, 1 buffer
                pl.BlockSpec((Hp, tn), lambda i, j: (0, j)),        # W2: tiled over output cols
                pl.BlockSpec((1, tn), lambda i, j: (0, j)),         # b2: tiled over output cols
            ],
            out_specs=pl.BlockSpec((block_b, tn), lambda i, j: (i, j)),
            scratch_shapes=[pltpu.VMEM((block_b, Hp), matmul_dtype)],  # cached h
            compiler_params=pltpu.CompilerParams(
                dimension_semantics=("parallel", "arbitrary"),
                vmem_limit_bytes=_vmem_limit_bytes(),
            ),
            cost_estimate=cost,
        )(xp, params["w1"], params["b1"], params["w2"], params["b2"])

    try:
        out = run(1)
    except Exception:
        # Fallback for Pallas versions that reject single-buffered BlockSpecs.
        out = run(None)

    if (Bp - B) or (Dp - D_in):
        out = out[:B, :D_in]
    return out


def init_params(key, input_dim, hidden_dim):
    """Deterministic init mirroring nn.Linear defaults: U(-1/sqrt(fan_in), 1/sqrt(fan_in))."""
    k1, k2, k3, k4 = jax.random.split(key, 4)
    bound1 = 1.0 / jnp.sqrt(input_dim)
    bound2 = 1.0 / jnp.sqrt(hidden_dim)
    w1 = jax.random.uniform(k1, (input_dim, hidden_dim), jnp.float32, -bound1, bound1)
    b1 = jax.random.uniform(k2, (1, hidden_dim), jnp.float32, -bound1, bound1)
    w2 = jax.random.uniform(k3, (hidden_dim, input_dim), jnp.float32, -bound2, bound2)
    b2 = jax.random.uniform(k4, (1, input_dim), jnp.float32, -bound2, bound2)
    return w1, b1, w2, b2


def reference_forward(x, w1, b1, w2, b2):
    h = jnp.maximum(x @ w1 + b1, 0.0)
    return jnp.maximum(h @ w2 + b2, 0.0)


if __name__ == "__main__":
    batch = 8
    input_dim = 64
    hidden_dim = 32

    key = jax.random.PRNGKey(0)
    kx, kp = jax.random.split(key)
    x = jax.random.normal(kx, (batch, input_dim), jnp.float32)
    w1, b1, w2, b2 = init_params(kp, input_dim, hidden_dim)

    # Pad + cast weights once; reuse across forward calls.
    params = prepare_params(w1, b1, w2, b2)

    out = autoencoder_forward(x, params)
    out = jax.block_until_ready(out)

    ref = reference_forward(x, w1, b1, w2, b2)
    assert out.shape == (batch, input_dim)
    # bf16 operands into the MXU (f32 accumulate) + bf16 h cache -> small relative
    # error vs the pure-f32 reference.
    max_err = float(jnp.max(jnp.abs(out - ref)))
    assert jnp.allclose(out, ref, atol=2e-2, rtol=2e-2), f"max |err| = {max_err}"

    print("KERNEL_OK")
</pallas_src>

<mosaic_0001>
module attributes {stable_mosaic.version = 11 : i64} {
  func.func @autoencoder_kernel(%arg0: i32, %arg1: i32, %arg2: memref<16x128xbf16, #tpu.memory_space<vmem>>, %arg3: memref<128x128xbf16, #tpu.memory_space<vmem>>, %arg4: memref<1x128xf32, #tpu.memory_space<vmem>>, %arg5: memref<128x128xbf16, #tpu.memory_space<vmem>>, %arg6: memref<1x128xf32, #tpu.memory_space<vmem>>, %arg7: memref<16x128xf32, #tpu.memory_space<vmem>>, %arg8: memref<16x128xbf16, #tpu.memory_space<vmem>>) attributes {dimension_semantics = [#tpu.dimension_semantics<parallel>, #tpu.dimension_semantics<arbitrary>], iteration_bounds = array<i64: 1, 1>, scalar_prefetch = 0 : i64, scratch_operands = 1 : i64, tpu.core_type = #tpu.core_type<tc>, window_params = [{transform_indices = @transform_0, window_bounds = array<i64: 16, 128>}, {pipeline_mode = #tpu.pipeline_mode<synchronous>, transform_indices = @transform_1, window_bounds = array<i64: 128, 128>}, {pipeline_mode = #tpu.pipeline_mode<synchronous>, transform_indices = @transform_2, window_bounds = array<i64: 1, 128>}, {transform_indices = @transform_3, window_bounds = array<i64: 128, 128>}, {transform_indices = @transform_4, window_bounds = array<i64: 1, 128>}, {transform_indices = @transform_5, window_bounds = array<i64: 16, 128>}]} {
    %c0_i32 = arith.constant 0 : i32
    %0 = arith.cmpi eq, %arg1, %c0_i32 : i32
    %1 = arith.extui %0 : i1 to i32
    %c0_i32_0 = arith.constant 0 : i32
    %2 = arith.cmpi ne, %1, %c0_i32_0 : i32
    scf.if %2 {
      %c0_9 = arith.constant 0 : index
      %c0_10 = arith.constant 0 : index
      %12 = vector.load %arg2[%c0_9, %c0_10] : memref<16x128xbf16, #tpu.memory_space<vmem>>, vector<16x128xbf16>
      %c0_11 = arith.constant 0 : index
      %c0_12 = arith.constant 0 : index
      %13 = vector.load %arg3[%c0_11, %c0_12] : memref<128x128xbf16, #tpu.memory_space<vmem>>, vector<128x128xbf16>
      %cst_13 = arith.constant dense<0.000000e+00> : vector<16x128xf32>
      %14 = tpu.matmul %12, %13, %cst_13 {dimension_numbers = #tpu.dot_dimension_numbers<[1], [0], [0], [1], [0, 0, 1, 1], [], []>} : vector<16x128xbf16>, vector<128x128xbf16>, vector<16x128xf32> -> vector<16x128xf32>
      %c0_14 = arith.constant 0 : index
      %c0_15 = arith.constant 0 : index
      %15 = vector.load %arg4[%c0_14, %c0_15] : memref<1x128xf32, #tpu.memory_space<vmem>>, vector<1x128xf32>
      %16 = vector.broadcast %15 : vector<1x128xf32> to vector<16x128xf32>
      %17 = arith.addf %14, %16 : vector<16x128xf32>
      %cst_16 = arith.constant 0.000000e+00 : f32
      %18 = vector.broadcast %cst_16 : f32 to vector<16x128xf32>
      %19 = arith.maximumf %17, %18 : vector<16x128xf32>
      %20 = arith.truncf %19 : vector<16x128xf32> to vector<16x128xbf16>
      %c0_17 = arith.constant 0 : index
      %c0_18 = arith.constant 0 : index
      %21 = vector.load %arg8[%c0_17, %c0_18] : memref<16x128xbf16, #tpu.memory_space<vmem>>, vector<16x128xbf16>
      tpu.vector_store %arg8[%c0_17, %c0_18], %20 {strides = array<i32>} : memref<16x128xbf16, #tpu.memory_space<vmem>>, vector<16x128xbf16>,
    } else {
    }
    %c0 = arith.constant 0 : index
    %c0_1 = arith.constant 0 : index
    %3 = vector.load %arg8[%c0, %c0_1] : memref<16x128xbf16, #tpu.memory_space<vmem>>, vector<16x128xbf16>
    %c0_2 = arith.constant 0 : index
    %c0_3 = arith.constant 0 : index
    %4 = vector.load %arg5[%c0_2, %c0_3] : memref<128x128xbf16, #tpu.memory_space<vmem>>, vector<128x128xbf16>
    %cst = arith.constant dense<0.000000e+00> : vector<16x128xf32>
    %5 = tpu.matmul %3, %4, %cst {dimension_numbers = #tpu.dot_dimension_numbers<[1], [0], [0], [1], [0, 0, 1, 1], [], []>} : vector<16x128xbf16>, vector<128x128xbf16>, vector<16x128xf32> -> vector<16x128xf32>
    %c0_4 = arith.constant 0 : index
    %c0_5 = arith.constant 0 : index
    %6 = vector.load %arg6[%c0_4, %c0_5] : memref<1x128xf32, #tpu.memory_space<vmem>>, vector<1x128xf32>
    %7 = vector.broadcast %6 : vector<1x128xf32> to vector<16x128xf32>
    %8 = arith.addf %5, %7 : vector<16x128xf32>
    %cst_6 = arith.constant 0.000000e+00 : f32
    %9 = vector.broadcast %cst_6 : f32 to vector<16x128xf32>
    %10 = arith.maximumf %8, %9 : vector<16x128xf32>
    %c0_7 = arith.constant 0 : index
    %c0_8 = arith.constant 0 : index
    %11 = vector.load %arg7[%c0_7, %c0_8] : memref<16x128xf32, #tpu.memory_space<vmem>>, vector<16x128xf32>
    tpu.vector_store %arg7[%c0_7, %c0_8], %10 {strides = array<i32>} : memref<16x128xf32, #tpu.memory_space<vmem>>, vector<16x128xf32>,
    return
  }
  func.func @transform_0(%arg0: i32, %arg1: i32) -> (i32, i32) {
    %c0_i32 = arith.constant 0 : i32
    %c0_i32_0 = arith.constant 0 : i32
    return %arg0, %c0_i32 : i32, i32
  }
  func.func @transform_1(%arg0: i32, %arg1: i32) -> (i32, i32) {
    %c0_i32 = arith.constant 0 : i32
    %c0_i32_0 = arith.constant 0 : i32
    %c0_i32_1 = arith.constant 0 : i32
    return %c0_i32, %c0_i32_0 : i32, i32
  }
  func.func @transform_2(%arg0: i32, %arg1: i32) -> (i32, i32) {
    %c0_i32 = arith.constant 0 : i32
    %c0_i32_0 = arith.constant 0 : i32
    %c0_i32_1 = arith.constant 0 : i32
    return %c0_i32, %c0_i32_0 : i32, i32
  }
  func.func @transform_3(%arg0: i32, %arg1: i32) -> (i32, i32) {
    %c0_i32 = arith.constant 0 : i32
    %c0_i32_0 = arith.constant 0 : i32
    return %c0_i32, %arg1 : i32, i32
  }
  func.func @transform_4(%arg0: i32, %arg1: i32) -> (i32, i32) {
    %c0_i32 = arith.constant 0 : i32
    %c0_i32_0 = arith.constant 0 : i32
    return %c0_i32, %arg1 : i32, i32
  }
  func.func @transform_5(%arg0: i32, %arg1: i32) -> (i32, i32) {
    %c0_i32 = arith.constant 0 : i32
    return %arg0, %arg1 : i32, i32
  }
}

module attributes {stable_mosaic.version = 11 : i64} {
  func.func @autoencoder_kernel(%arg0: i32, %arg1: i32, %arg2: memref<16x128xbf16, #tpu.memory_space<vmem>>, %arg3: memref<128x128xbf16, #tpu.memory_space<vmem>>, %arg4: memref<1x128xf32, #tpu.memory_space<vmem>>, %arg5: memref<128x128xbf16, #tpu.memory_space<vmem>>, %arg6: memref<1x128xf32, #tpu.memory_space<vmem>>, %arg7: memref<16x128xf32, #tpu.memory_space<vmem>>, %arg8: memref<16x128xbf16, #tpu.memory_space<vmem>>) attributes {dimension_semantics = [#tpu.dimension_semantics<parallel>, #tpu.dimension_semantics<arbitrary>], iteration_bounds = array<i64: 1, 1>, scalar_prefetch = 0 : i64, scratch_operands = 1 : i64, tpu.core_type = #tpu.core_type<tc>, window_params = [{transform_indices = @transform_0, window_bounds = array<i64: 16, 128>}, {pipeline_mode = #tpu.pipeline_mode<synchronous>, transform_indices = @transform_1, window_bounds = array<i64: 128, 128>}, {pipeline_mode = #tpu.pipeline_mode<synchronous>, transform_indices = @transform_2, window_bounds = array<i64: 1, 128>}, {transform_indices = @transform_3, window_bounds = array<i64: 128, 128>}, {transform_indices = @transform_4, window_bounds = array<i64: 1, 128>}, {transform_indices = @transform_5, window_bounds = array<i64: 16, 128>}]} {
    %c0_i32 = arith.constant 0 : i32
    %0 = arith.cmpi eq, %arg1, %c0_i32 : i32
    %1 = arith.extui %0 : i1 to i32
    %c0_i32_0 = arith.constant 0 : i32
    %2 = arith.cmpi ne, %1, %c0_i32_0 : i32
    scf.if %2 {
      %c0_9 = arith.constant 0 : index
      %c0_10 = arith.constant 0 : index
      %12 = vector.load %arg2[%c0_9, %c0_10] : memref<16x128xbf16, #tpu.memory_space<vmem>>, vector<16x128xbf16>
      %c0_11 = arith.constant 0 : index
      %c0_12 = arith.constant 0 : index
      %13 = vector.load %arg3[%c0_11, %c0_12] : memref<128x128xbf16, #tpu.memory_space<vmem>>, vector<128x128xbf16>
      %cst_13 = arith.constant dense<0.000000e+00> : vector<16x128xf32>
      %14 = tpu.matmul %12, %13, %cst_13 {dimension_numbers = #tpu.dot_dimension_numbers<[1], [0], [0], [1], [0, 0, 1, 1], [], []>} : vector<16x128xbf16>, vector<128x128xbf16>, vector<16x128xf32> -> vector<16x128xf32>
      %c0_14 = arith.constant 0 : index
      %c0_15 = arith.constant 0 : index
      %15 = vector.load %arg4[%c0_14, %c0_15] : memref<1x128xf32, #tpu.memory_space<vmem>>, vector<1x128xf32>
      %16 = vector.broadcast %15 : vector<1x128xf32> to vector<16x128xf32>
      %17 = arith.addf %14, %16 : vector<16x128xf32>
      %cst_16 = arith.constant 0.000000e+00 : f32
      %18 = vector.broadcast %cst_16 : f32 to vector<16x128xf32>
      %19 = arith.maximumf %17, %18 : vector<16x128xf32>
      %20 = arith.truncf %19 : vector<16x128xf32> to vector<16x128xbf16>
      %c0_17 = arith.constant 0 : index
      %c0_18 = arith.constant 0 : index
      %21 = vector.load %arg8[%c0_17, %c0_18] : memref<16x128xbf16, #tpu.memory_space<vmem>>, vector<16x128xbf16>
      tpu.vector_store %arg8[%c0_17, %c0_18], %20 {strides = array<i32>} : memref<16x128xbf16, #tpu.memory_space<vmem>>, vector<16x128xbf16>,
    } else {
    }
    %c0 = arith.constant 0 : index
    %c0_1 = arith.constant 0 : index
    %3 = vector.load %arg8[%c0, %c0_1] : memref<16x128xbf16, #tpu.memory_space<vmem>>, vector<16x128xbf16>
    %c0_2 = arith.constant 0 : index
    %c0_3 = arith.constant 0 : index
    %4 = vector.load %arg5[%c0_2, %c0_3] : memref<128x128xbf16, #tpu.memory_space<vmem>>, vector<128x128xbf16>
    %cst = arith.constant dense<0.000000e+00> : vector<16x128xf32>
    %5 = tpu.matmul %3, %4, %cst {dimension_numbers = #tpu.dot_dimension_numbers<[1], [0], [0], [1], [0, 0, 1, 1], [], []>} : vector<16x128xbf16>, vector<128x128xbf16>, vector<16x128xf32> -> vector<16x128xf32>
    %c0_4 = arith.constant 0 : index
    %c0_5 = arith.constant 0 : index
    %6 = vector.load %arg6[%c0_4, %c0_5] : memref<1x128xf32, #tpu.memory_space<vmem>>, vector<1x128xf32>
    %7 = vector.broadcast %6 : vector<1x128xf32> to vector<16x128xf32>
    %8 = arith.addf %5, %7 : vector<16x128xf32>
    %cst_6 = arith.constant 0.000000e+00 : f32
    %9 = vector.broadcast %cst_6 : f32 to vector<16x128xf32>
    %10 = arith.maximumf %8, %9 : vector<16x128xf32>
    %c0_7 = arith.constant 0 : index
    %c0_8 = arith.constant 0 : index
    %11 = vector.load %arg7[%c0_7, %c0_8] : memref<16x128xf32, #tpu.memory_space<vmem>>, vector<16x128xf32>
    tpu.vector_store %arg7[%c0_7, %c0_8], %10 {strides = array<i32>} : memref<16x128xf32, #tpu.memory_space<vmem>>, vector<16x128xf32>,
    return
  }
  func.func @transform_0(%arg0: i32, %arg1: i32) -> (i32, i32) {
    %c0_i32 = arith.constant 0 : i32
    %c0_i32_0 = arith.constant 0 : i32
    return %arg0, %c0_i32 : i32, i32
  }
  func.func @transform_1(%arg0: i32, %arg1: i32) -> (i32, i32) {
    %c0_i32 = arith.constant 0 : i32
    %c0_i32_0 = arith.constant 0 : i32
    %c0_i32_1 = arith.constant 0 : i32
    return %c0_i32, %c0_i32_0 : i32, i32
  }
  func.func @transform_2(%arg0: i32, %arg1: i32) -> (i32, i32) {
    %c0_i32 = arith.constant 0 : i32
    %c0_i32_0 = arith.constant 0 : i32
    %c0_i32_1 = arith.constant 0 : i32
    return %c0_i32, %c0_i32_0 : i32, i32
  }
  func.func @transform_3(%arg0: i32, %arg1: i32) -> (i32, i32) {
    %c0_i32 = arith.constant 0 : i32
    %c0_i32_0 = arith.constant 0 : i32
    return %c0_i32, %arg1 : i32, i32
  }
  func.func @transform_4(%arg0: i32, %arg1: i32) -> (i32, i32) {
    %c0_i32 = arith.constant 0 : i32
    %c0_i32_0 = arith.constant 0 : i32
    return %c0_i32, %arg1 : i32, i32
  }
  func.func @transform_5(%arg0: i32, %arg1: i32) -> (i32, i32) {
    %c0_i32 = arith.constant 0 : i32
    return %arg0, %arg1 : i32, i32
  }
}

</mosaic_0001>

<llo_original>
// kernel: tpu_custom_call.1
$region0: #{tpu_custom_call.1}
  #allocation0 [shape = 'u32[]', space=smem, size = 0x4, offset = 0x4, fixed_abs, tag = 'smem constant byte address 0x4 - core index']
  #allocation1 [shape = 'u32[72,128]{1,0:T(1,128)}', space=vmem, size = 0x9000, scoped, tag = 'internal scratch']
  #allocation2 [shape = 'bf16[16,128]{1,0:T(8,128)(2,1)}', space=vmem, size = 0x1000, scoped, tag = 'scratch operand']
  %s0 = inlined_call_operand.hbm [shape: bf16[16,128], index: 0, kind: input, shape index: {}]
  %s1 = inlined_call_operand.hbm [shape: bf16[128,128], index: 1, kind: input, shape index: {}]
  %s2 = inlined_call_operand.vmem [shape: f32[1,128], index: 2, kind: input, shape index: {}]
  %s3 = inlined_call_operand.hbm [shape: bf16[128,128], index: 3, kind: input, shape index: {}]
  %s4 = inlined_call_operand.vmem [shape: f32[1,128], index: 4, kind: input, shape index: {}]
  %s5 = inlined_call_operand.hbm [shape: f32[16,128], index: 5, kind: output, shape index: {}]
  %s6 = sld [smem:[#allocation0]]
  $region46: #{tpu_custom_call.1} parent=0
    _
  %s8 = ssub.s32 1, %s6
  %s9 = scalar_select 0, %s8, %s6
  $region1: #{tpu_custom_call.1} parent=0
    #allocation3 [shape = 'u8[4096]{0}', space=vmem, size = 0x1000, scoped, tag = 'input window, operand 0, single buffered']
    #allocation4 [shape = 's32[1]{0}', space=sflag, size = 0x4, scoped, tag = 'scoped memory for tpu_custom_call.1']
    #allocation5 [shape = 's32[1]{0}', space=sflag, size = 0x4, scoped, tag = 'scoped memory for tpu_custom_call.1']
    #allocation6 [shape = 'u8[32768]{0}', space=vmem, size = 0x8000, scoped, tag = 'input window, operand 1, single buffered']
    #allocation7 [shape = 's32[1]{0}', space=sflag, size = 0x4, scoped, tag = 'scoped memory for tpu_custom_call.1']
    #allocation8 [shape = 'u8[32768]{0}', space=vmem, size = 0x8000, scoped, tag = 'input window, operand 3, single buffered']
    #allocation9 [shape = 'u8[8192]{0}', space=vmem, size = 0x2000, scoped, tag = 'output window, operand 0, single buffered']
    %10 = vsyncpa [#allocation4], 0
    %11 = vsyncpa [#allocation7], 0
    %12 = vsyncpa [#allocation5], 0
    // Predicated region
    $region2: #{tpu_custom_call.1} parent=1 // pred_check
      _
    $region3: #{tpu_custom_call.1} parent=1 // pred_check_branch
      %14 = sbr.rel (0) target = $region5
    $region4: #{tpu_custom_call.1} parent=1 // pred_region
      %16 = vsyncadd [#allocation4], 0
      %s17 = sshll.u32 %s0, 4
      %s18 = int_to_ptr.hbm [resolvable:$true] %s17
      %s19 = sshll.u32 [#allocation3], 4
      %s20 = int_to_ptr.vmem [resolvable:$true] %s19
      %25 = dma.hbm_to_vmem [thread:$0]  %s18, 128, %s20, [#allocation4], 64, 64, 4
    $region5: #{tpu_custom_call.1} parent=1 // pred_fallthru
      _
    // Predicated region
    $region6: #{tpu_custom_call.1} parent=1 // pred_check
      _
    $region7: #{tpu_custom_call.1} parent=1 // pred_check_branch
      %27 = sbr.rel (0) target = $region9
    $region8: #{tpu_custom_call.1} parent=1 // pred_region
      %29 = vsyncadd [#allocation7], 0
      %s30 = sshll.u32 %s1, 4
      %s31 = int_to_ptr.hbm [resolvable:$true] %s30
      %s32 = sshll.u32 [#allocation6], 4
      %s33 = int_to_ptr.vmem [resolvable:$true] %s32
      %38 = dma.hbm_to_vmem [thread:$0]  %s31, 1024, %s33, [#allocation7], 64, 64, 4
    $region9: #{tpu_custom_call.1} parent=1 // pred_fallthru
      _
    // Predicated region
    $region10: #{tpu_custom_call.1} parent=1 // pred_check
      _
    $region11: #{tpu_custom_call.1} parent=1 // pred_check_branch
      %40 = sbr.rel (0) target = $region13
    $region12: #{tpu_custom_call.1} parent=1 // pred_region
      _
    $region13: #{tpu_custom_call.1} parent=1 // pred_fallthru
      _
    // Predicated region
    $region14: #{tpu_custom_call.1} parent=1 // pred_check
      _
    $region15: #{tpu_custom_call.1} parent=1 // pred_check_branch
      %42 = sbr.rel (0) target = $region17
    $region16: #{tpu_custom_call.1} parent=1 // pred_region
      %44 = vsyncadd [#allocation7], 0
      %s45 = sshll.u32 %s3, 4
      %s46 = int_to_ptr.hbm [resolvable:$true] %s45
      %s47 = sshll.u32 [#allocation8], 4
      %s48 = int_to_ptr.vmem [resolvable:$true] %s47
      %53 = dma.hbm_to_vmem [thread:$0]  %s46, 1024, %s48, [#allocation7], 64, 64, 4
    $region17: #{tpu_custom_call.1} parent=1 // pred_fallthru
      _
    // Predicated region
    $region18: #{tpu_custom_call.1} parent=1 // pred_check
      _
    $region19: #{tpu_custom_call.1} parent=1 // pred_check_branch
      %55 = sbr.rel (0) target = $region21
    $region20: #{tpu_custom_call.1} parent=1 // pred_region
      _
    $region21: #{tpu_custom_call.1} parent=1 // pred_fallthru
      _
    // Predicated region
    $region22: #{tpu_custom_call.1} parent=1 // pred_check
      _
    $region23: #{tpu_custom_call.1} parent=1 // pred_check_branch
      %57 = sbr.rel (0) target = $region25
    $region24: #{tpu_custom_call.1} parent=1 // pred_region
      %59 = dma.done [#allocation4], 128
    $region25: #{tpu_custom_call.1} parent=1 // pred_fallthru
      _
    // Predicated region
    $region26: #{tpu_custom_call.1} parent=1 // pred_check
      _
    $region27: #{tpu_custom_call.1} parent=1 // pred_check_branch
      %61 = sbr.rel (0) target = $region29
    $region28: #{tpu_custom_call.1} parent=1 // pred_region
      %63 = dma.done [#allocation7], 1024
    $region29: #{tpu_custom_call.1} parent=1 // pred_fallthru
      _
    // Predicated region
    $region30: #{tpu_custom_call.1} parent=1 // pred_check
      _
    $region31: #{tpu_custom_call.1} parent=1 // pred_check_branch
      %65 = sbr.rel (0) target = $region33
    $region32: #{tpu_custom_call.1} parent=1 // pred_region
      %67 = dma.done [#allocation7], 1024
    $region33: #{tpu_custom_call.1} parent=1 // pred_fallthru
      _
    %p68 = scmp.eq.s32.totalorder 0, 0
    // Predicated region
    $region34: #{tpu_custom_call.1} parent=1 // pred_check
      %p69 = pneg %p68
    $region35: #{tpu_custom_call.1} parent=1 // pred_check_branch
      %71 = sbr.rel (%p69) target = $region37
    $region36: #{tpu_custom_call.1} parent=1 // pred_region
      %v72 = vld [vmem:[#allocation3] sm:$0xf]
      %v73 = vld [vmem:[#allocation3 + $0x4] sm:$0xf]
      %v74 = vld [vmem:[#allocation6] sm:$0xf]
      %v75 = vld [vmem:[#allocation6 + $0x4] sm:$0xf]
      %v76 = vld [vmem:[#allocation6 + $0x8] sm:$0xf]
      %v77 = vld [vmem:[#allocation6 + $0xc] sm:$0xf]
      %v78 = vld [vmem:[#allocation6 + $0x10] sm:$0xf]
      %v79 = vld [vmem:[#allocation6 + $0x14] sm:$0xf]
      %v80 = vld [vmem:[#allocation6 + $0x18] sm:$0xf]
      %v81 = vld [vmem:[#allocation6 + $0x1c] sm:$0xf]
      %v82 = vld [vmem:[#allocation6 + $0x20] sm:$0xf]
      %v83 = vld [vmem:[#allocation6 + $0x24] sm:$0xf]
      %v84 = vld [vmem:[#allocation6 + $0x28] sm:$0xf]
      %v85 = vld [vmem:[#allocation6 + $0x2c] sm:$0xf]
      %v86 = vld [vmem:[#allocation6 + $0x30] sm:$0xf]
      %v87 = vld [vmem:[#allocation6 + $0x34] sm:$0xf]
      %v88 = vld [vmem:[#allocation6 + $0x38] sm:$0xf]
      %v89 = vld [vmem:[#allocation6 + $0x3c] sm:$0xf]
      %v90 = vld [vmem:[%s2] sm:$0x1]
      %v92 = vperm.slane %v90, 0
      %v96 = vunpack.c.l.b16 %v72
      %v97 = vunpack.c.l.b16 %v73
      %v98 = vpack.c.b16 %v97, %v96
      %v116 = vunpack.c.l.b16 %v74
      %v117 = vunpack.c.l.b16 %v75
      %v118 = vunpack.c.l.b16 %v76
      %v119 = vunpack.c.l.b16 %v77
      %v120 = vunpack.c.l.b16 %v78
      %v121 = vunpack.c.l.b16 %v79
      %v122 = vunpack.c.l.b16 %v80
      %v123 = vunpack.c.l.b16 %v81
      %v124 = vunpack.c.l.b16 %v82
      %v125 = vunpack.c.l.b16 %v83
      %v126 = vunpack.c.l.b16 %v84
      %v127 = vunpack.c.l.b16 %v85
      %v128 = vunpack.c.l.b16 %v86
      %v129 = vunpack.c.l.b16 %v87
      %v130 = vunpack.c.l.b16 %v88
      %v131 = vunpack.c.l.b16 %v89
      %v132 = vpack.c.b16 %v117, %v116
      %v133 = vpack.c.b16 %v119, %v118
      %v134 = vpack.c.b16 %v121, %v120
      %v135 = vpack.c.b16 %v123, %v122
      %v136 = vpack.c.b16 %v125, %v124
      %v137 = vpack.c.b16 %v127, %v126
      %v138 = vpack.c.b16 %v129, %v128
      %v139 = vpack.c.b16 %v131, %v130
      %148 = vmatpush.bf16.msra.mxu0 %v139
      %149 = vmatpush.bf16.msra.mxu0 %v138
      %150 = vmatpush.bf16.msra.mxu0 %v137
      %151 = vmatpush.bf16.msra.mxu0 %v136
      %152 = vmatpush.bf16.msra.mxu0 %v135
      %153 = vmatpush.bf16.msra.mxu0 %v134
      %154 = vmatpush.bf16.msra.mxu0 %v133
      %155 = vmatpush.bf16.msra.mxu0 %v132
      %156 = vmatmul.bf16.gmra.mxu0 %v98
      %v157 = vpop.f32.mrf.mxu0
      %v158 = vadd.f32 %v92, %v157
      %v159 = vpop.f32.mrf.mxu0
      %v160 = vadd.f32 %v92, %v159
      %161 = vdwg.mxu0
      %v162 = vmax.f32 %v158, 0.0
      %v163 = vmax.f32 %v160, 0.0
      %v164 = vpack.c.bf16 %v162, %v162
      %v165 = vpack.c.bf16 %v163, %v163
      %166 = vst [vmem:[#allocation2] sm:$0xf] %v164
      %167 = vst [vmem:[#allocation2 + $0x4] sm:$0xf] %v165
    $region37: #{tpu_custom_call.1} parent=1 // pred_fallthru
      _
    %v168 = vld [vmem:[#allocation2] sm:$0xf]
    %v169 = vld [vmem:[#allocation2 + $0x4] sm:$0xf]
    %v170 = vld [vmem:[#allocation8] sm:$0xf]
    %v171 = vld [vmem:[#allocation8 + $0x4] sm:$0xf]
    %v172 = vld [vmem:[#allocation8 + $0x8] sm:$0xf]
    %v173 = vld [vmem:[#allocation8 + $0xc] sm:$0xf]
    %v174 = vld [vmem:[#allocation8 + $0x10] sm:$0xf]
    %v175 = vld [vmem:[#allocation8 + $0x14] sm:$0xf]
    %v176 = vld [vmem:[#allocation8 + $0x18] sm:$0xf]
    %v177 = vld [vmem:[#allocation8 + $0x1c] sm:$0xf]
    %v178 = vld [vmem:[#allocation8 + $0x20] sm:$0xf]
    %v179 = vld [vmem:[#allocation8 + $0x24] sm:$0xf]
    %v180 = vld [vmem:[#allocation8 + $0x28] sm:$0xf]
    %v181 = vld [vmem:[#allocation8 + $0x2c] sm:$0xf]
    %v182 = vld [vmem:[#allocation8 + $0x30] sm:$0xf]
    %v183 = vld [vmem:[#allocation8 + $0x34] sm:$0xf]
    %v184 = vld [vmem:[#allocation8 + $0x38] sm:$0xf]
    %v185 = vld [vmem:[#allocation8 + $0x3c] sm:$0xf]
    %v186 = vld [vmem:[%s4] sm:$0x1]
    %v188 = vperm.slane %v186, 0
    %v192 = vunpack.c.l.b16 %v168
    %v193 = vunpack.c.l.b16 %v169
    %v194 = vpack.c.b16 %v193, %v192
    %v212 = vunpack.c.l.b16 %v170
    %v213 = vunpack.c.l.b16 %v171
    %v214 = vunpack.c.l.b16 %v172
    %v215 = vunpack.c.l.b16 %v173
    %v216 = vunpack.c.l.b16 %v174
    %v217 = vunpack.c.l.b16 %v175
    %v218 = vunpack.c.l.b16 %v176
    %v219 = vunpack.c.l.b16 %v177
    %v220 = vunpack.c.l.b16 %v178
    %v221 = vunpack.c.l.b16 %v179
    %v222 = vunpack.c.l.b16 %v180
    %v223 = vunpack.c.l.b16 %v181
    %v224 = vunpack.c.l.b16 %v182
    %v225 = vunpack.c.l.b16 %v183
    %v226 = vunpack.c.l.b16 %v184
    %v227 = vunpack.c.l.b16 %v185
    %v228 = vpack.c.b16 %v213, %v212
    %v229 = vpack.c.b16 %v215, %v214
    %v230 = vpack.c.b16 %v217, %v216
    %v231 = vpack.c.b16 %v219, %v218
    %v232 = vpack.c.b16 %v221, %v220
    %v233 = vpack.c.b16 %v223, %v222
    %v234 = vpack.c.b16 %v225, %v224
    %v235 = vpack.c.b16 %v227, %v226
    %244 = vmatpush.bf16.msra.mxu0 %v235
    %245 = vmatpush.bf16.msra.mxu0 %v234
    %246 = vmatpush.bf16.msra.mxu0 %v233
    %247 = vmatpush.bf16.msra.mxu0 %v232
    %248 = vmatpush.bf16.msra.mxu0 %v231
    %249 = vmatpush.bf16.msra.mxu0 %v230
    %250 = vmatpush.bf16.msra.mxu0 %v229
    %251 = vmatpush.bf16.msra.mxu0 %v228
    %252 = vmatmul.bf16.gmra.mxu0 %v194
    %v253 = vpop.f32.mrf.mxu0
    %v254 = vadd.f32 %v188, %v253
    %v255 = vpop.f32.mrf.mxu0
    %v256 = vadd.f32 %v188, %v255
    %257 = vdwg.mxu0
    %v258 = vmax.f32 %v254, 0.0
    %v259 = vmax.f32 %v256, 0.0
    %260 = vst [vmem:[#allocation9] sm:$0xff] %v258
    %261 = vst [vmem:[#allocation9 + $0x8] sm:$0xff] %v259
    // Predicated region
    $region38: #{tpu_custom_call.1} parent=1 // pred_check
      _
    $region39: #{tpu_custom_call.1} parent=1 // pred_check_branch
      %263 = sbr.rel (0) target = $region41
    $region40: #{tpu_custom_call.1} parent=1 // pred_region
      %265 = vsyncadd [#allocation5], 0
      %s266 = sshll.u32 [#allocation9], 4
      %s267 = int_to_ptr.vmem [resolvable:$true] %s266
      %s268 = sshll.u32 %s5, 4
      %s269 = int_to_ptr.hbm [resolvable:$true] %s268
      %274 = dma.vmem_to_hbm [thread:$0]  %s267, 256, %s269, [#allocation5], 128, 128, 8
    $region41: #{tpu_custom_call.1} parent=1 // pred_fallthru
      _
    // Predicated region
    $region42: #{tpu_custom_call.1} parent=1 // pred_check
      _
    $region43: #{tpu_custom_call.1} parent=1 // pred_check_branch
      %276 = sbr.rel (0) target = $region45
    $region44: #{tpu_custom_call.1} parent=1 // pred_region
      %278 = dma.done [#allocation5], 256
    $region45: #{tpu_custom_call.1} parent=1 // pred_fallthru
      _
    %279 = vsyncpa [#allocation4], 1
    %280 = vsyncpa [#allocation7], 1
    %281 = vsyncpa [#allocation5], 1

// kernel: tpu_custom_call.1
$region0: #{tpu_custom_call.1}
  #allocation0 [shape = 'u32[]', space=smem, size = 0x4, offset = 0x4, fixed_abs, tag = 'smem constant byte address 0x4 - core index']
  #allocation1 [shape = 'u32[72,128]{1,0:T(1,128)}', space=vmem, size = 0x9000, scoped, tag = 'internal scratch']
  #allocation2 [shape = 'bf16[16,128]{1,0:T(8,128)(2,1)}', space=vmem, size = 0x1000, scoped, tag = 'scratch operand']
  %s0 = inlined_call_operand.hbm [shape: bf16[16,128], index: 0, kind: input, shape index: {}]
  %s1 = inlined_call_operand.hbm [shape: bf16[128,128], index: 1, kind: input, shape index: {}]
  %s2 = inlined_call_operand.vmem [shape: f32[1,128], index: 2, kind: input, shape index: {}]
  %s3 = inlined_call_operand.hbm [shape: bf16[128,128], index: 3, kind: input, shape index: {}]
  %s4 = inlined_call_operand.vmem [shape: f32[1,128], index: 4, kind: input, shape index: {}]
  %s5 = inlined_call_operand.hbm [shape: f32[16,128], index: 5, kind: output, shape index: {}]
  %s6 = sld [smem:[#allocation0]]
  $region46: #{tpu_custom_call.1} parent=0
    _
  %s8 = ssub.s32 1, %s6
  %s9 = scalar_select 0, %s8, %s6
  $region1: #{tpu_custom_call.1} parent=0
    #allocation3 [shape = 'u8[4096]{0}', space=vmem, size = 0x1000, scoped, tag = 'input window, operand 0, single buffered']
    #allocation4 [shape = 's32[1]{0}', space=sflag, size = 0x4, scoped, tag = 'scoped memory for tpu_custom_call.1']
    #allocation5 [shape = 's32[1]{0}', space=sflag, size = 0x4, scoped, tag = 'scoped memory for tpu_custom_call.1']
    #allocation6 [shape = 'u8[32768]{0}', space=vmem, size = 0x8000, scoped, tag = 'input window, operand 1, single buffered']
    #allocation7 [shape = 's32[1]{0}', space=sflag, size = 0x4, scoped, tag = 'scoped memory for tpu_custom_call.1']
    #allocation8 [shape = 'u8[32768]{0}', space=vmem, size = 0x8000, scoped, tag = 'input window, operand 3, single buffered']
    #allocation9 [shape = 'u8[8192]{0}', space=vmem, size = 0x2000, scoped, tag = 'output window, operand 0, single buffered']
    %10 = vsyncpa [#allocation4], 0
    %11 = vsyncpa [#allocation7], 0
    %12 = vsyncpa [#allocation5], 0
    // Predicated region
    $region2: #{tpu_custom_call.1} parent=1 // pred_check
      _
    $region3: #{tpu_custom_call.1} parent=1 // pred_check_branch
      %14 = sbr.rel (0) target = $region5
    $region4: #{tpu_custom_call.1} parent=1 // pred_region
      %16 = vsyncadd [#allocation4], 0
      %s17 = sshll.u32 %s0, 4
      %s18 = int_to_ptr.hbm [resolvable:$true] %s17
      %s19 = sshll.u32 [#allocation3], 4
      %s20 = int_to_ptr.vmem [resolvable:$true] %s19
      %25 = dma.hbm_to_vmem [thread:$0]  %s18, 128, %s20, [#allocation4], 64, 64, 4
    $region5: #{tpu_custom_call.1} parent=1 // pred_fallthru
      _
    // Predicated region
    $region6: #{tpu_custom_call.1} parent=1 // pred_check
      _
    $region7: #{tpu_custom_call.1} parent=1 // pred_check_branch
      %27 = sbr.rel (0) target = $region9
    $region8: #{tpu_custom_call.1} parent=1 // pred_region
      %29 = vsyncadd [#allocation7], 0
      %s30 = sshll.u32 %s1, 4
      %s31 = int_to_ptr.hbm [resolvable:$true] %s30
      %s32 = sshll.u32 [#allocation6], 4
      %s33 = int_to_ptr.vmem [resolvable:$true] %s32
      %38 = dma.hbm_to_vmem [thread:$0]  %s31, 1024, %s33, [#allocation7], 64, 64, 4
    $region9: #{tpu_custom_call.1} parent=1 // pred_fallthru
      _
    // Predicated region
    $region10: #{tpu_custom_call.1} parent=1 // pred_check
      _
    $region11: #{tpu_custom_call.1} parent=1 // pred_check_branch
      %40 = sbr.rel (0) target = $region13
    $region12: #{tpu_custom_call.1} parent=1 // pred_region
      _
    $region13: #{tpu_custom_call.1} parent=1 // pred_fallthru
      _
    // Predicated region
    $region14: #{tpu_custom_call.1} parent=1 // pred_check
      _
    $region15: #{tpu_custom_call.1} parent=1 // pred_check_branch
      %42 = sbr.rel (0) target = $region17
    $region16: #{tpu_custom_call.1} parent=1 // pred_region
      %44 = vsyncadd [#allocation7], 0
      %s45 = sshll.u32 %s3, 4
      %s46 = int_to_ptr.hbm [resolvable:$true] %s45
      %s47 = sshll.u32 [#allocation8], 4
      %s48 = int_to_ptr.vmem [resolvable:$true] %s47
      %53 = dma.hbm_to_vmem [thread:$0]  %s46, 1024, %s48, [#allocation7], 64, 64, 4
    $region17: #{tpu_custom_call.1} parent=1 // pred_fallthru
      _
    // Predicated region
    $region18: #{tpu_custom_call.1} parent=1 // pred_check
      _
    $region19: #{tpu_custom_call.1} parent=1 // pred_check_branch
      %55 = sbr.rel (0) target = $region21
    $region20: #{tpu_custom_call.1} parent=1 // pred_region
      _
    $region21: #{tpu_custom_call.1} parent=1 // pred_fallthru
      _
    // Predicated region
    $region22: #{tpu_custom_call.1} parent=1 // pred_check
      _
    $region23: #{tpu_custom_call.1} parent=1 // pred_check_branch
      %57 = sbr.rel (0) target = $region25
    $region24: #{tpu_custom_call.1} parent=1 // pred_region
      %59 = dma.done [#allocation4], 128
    $region25: #{tpu_custom_call.1} parent=1 // pred_fallthru
      _
    // Predicated region
    $region26: #{tpu_custom_call.1} parent=1 // pred_check
      _
    $region27: #{tpu_custom_call.1} parent=1 // pred_check_branch
      %61 = sbr.rel (0) target = $region29
    $region28: #{tpu_custom_call.1} parent=1 // pred_region
      %63 = dma.done [#allocation7], 1024
    $region29: #{tpu_custom_call.1} parent=1 // pred_fallthru
      _
    // Predicated region
    $region30: #{tpu_custom_call.1} parent=1 // pred_check
      _
    $region31: #{tpu_custom_call.1} parent=1 // pred_check_branch
      %65 = sbr.rel (0) target = $region33
    $region32: #{tpu_custom_call.1} parent=1 // pred_region
      %67 = dma.done [#allocation7], 1024
    $region33: #{tpu_custom_call.1} parent=1 // pred_fallthru
      _
    %p68 = scmp.eq.s32.totalorder 0, 0
    // Predicated region
    $region34: #{tpu_custom_call.1} parent=1 // pred_check
      %p69 = pneg %p68
    $region35: #{tpu_custom_call.1} parent=1 // pred_check_branch
      %71 = sbr.rel (%p69) target = $region37
    $region36: #{tpu_custom_call.1} parent=1 // pred_region
      %v72 = vld [vmem:[#allocation3] sm:$0xf]
      %v73 = vld [vmem:[#allocation3 + $0x4] sm:$0xf]
      %v74 = vld [vmem:[#allocation6] sm:$0xf]
      %v75 = vld [vmem:[#allocation6 + $0x4] sm:$0xf]
      %v76 = vld [vmem:[#allocation6 + $0x8] sm:$0xf]
      %v77 = vld [vmem:[#allocation6 + $0xc] sm:$0xf]
      %v78 = vld [vmem:[#allocation6 + $0x10] sm:$0xf]
      %v79 = vld [vmem:[#allocation6 + $0x14] sm:$0xf]
      %v80 = vld [vmem:[#allocation6 + $0x18] sm:$0xf]
      %v81 = vld [vmem:[#allocation6 + $0x1c] sm:$0xf]
      %v82 = vld [vmem:[#allocation6 + $0x20] sm:$0xf]
      %v83 = vld [vmem:[#allocation6 + $0x24] sm:$0xf]
      %v84 = vld [vmem:[#allocation6 + $0x28] sm:$0xf]
      %v85 = vld [vmem:[#allocation6 + $0x2c] sm:$0xf]
      %v86 = vld [vmem:[#allocation6 + $0x30] sm:$0xf]
      %v87 = vld [vmem:[#allocation6 + $0x34] sm:$0xf]
      %v88 = vld [vmem:[#allocation6 + $0x38] sm:$0xf]
      %v89 = vld [vmem:[#allocation6 + $0x3c] sm:$0xf]
      %v90 = vld [vmem:[%s2] sm:$0x1]
      %v92 = vperm.slane %v90, 0
      %v96 = vunpack.c.l.b16 %v72
      %v97 = vunpack.c.l.b16 %v73
      %v98 = vpack.c.b16 %v97, %v96
      %v116 = vunpack.c.l.b16 %v74
      %v117 = vunpack.c.l.b16 %v75
      %v118 = vunpack.c.l.b16 %v76
      %v119 = vunpack.c.l.b16 %v77
      %v120 = vunpack.c.l.b16 %v78
      %v121 = vunpack.c.l.b16 %v79
      %v122 = vunpack.c.l.b16 %v80
      %v123 = vunpack.c.l.b16 %v81
      %v124 = vunpack.c.l.b16 %v82
      %v125 = vunpack.c.l.b16 %v83
      %v126 = vunpack.c.l.b16 %v84
      %v127 = vunpack.c.l.b16 %v85
      %v128 = vunpack.c.l.b16 %v86
      %v129 = vunpack.c.l.b16 %v87
      %v130 = vunpack.c.l.b16 %v88
      %v131 = vunpack.c.l.b16 %v89
      %v132 = vpack.c.b16 %v117, %v116
      %v133 = vpack.c.b16 %v119, %v118
      %v134 = vpack.c.b16 %v121, %v120
      %v135 = vpack.c.b16 %v123, %v122
      %v136 = vpack.c.b16 %v125, %v124
      %v137 = vpack.c.b16 %v127, %v126
      %v138 = vpack.c.b16 %v129, %v128
      %v139 = vpack.c.b16 %v131, %v130
      %148 = vmatpush.bf16.msra.mxu0 %v139
      %149 = vmatpush.bf16.msra.mxu0 %v138
      %150 = vmatpush.bf16.msra.mxu0 %v137
      %151 = vmatpush.bf16.msra.mxu0 %v136
      %152 = vmatpush.bf16.msra.mxu0 %v135
      %153 = vmatpush.bf16.msra.mxu0 %v134
      %154 = vmatpush.bf16.msra.mxu0 %v133
      %155 = vmatpush.bf16.msra.mxu0 %v132
      %156 = vmatmul.bf16.gmra.mxu0 %v98
      %v157 = vpop.f32.mrf.mxu0
      %v158 = vadd.f32 %v92, %v157
      %v159 = vpop.f32.mrf.mxu0
      %v160 = vadd.f32 %v92, %v159
      %161 = vdwg.mxu0
      %v162 = vmax.f32 %v158, 0.0
      %v163 = vmax.f32 %v160, 0.0
      %v164 = vpack.c.bf16 %v162, %v162
      %v165 = vpack.c.bf16 %v163, %v163
      %166 = vst [vmem:[#allocation2] sm:$0xf] %v164
      %167 = vst [vmem:[#allocation2 + $0x4] sm:$0xf] %v165
    $region37: #{tpu_custom_call.1} parent=1 // pred_fallthru
      _
    %v168 = vld [vmem:[#allocation2] sm:$0xf]
    %v169 = vld [vmem:[#allocation2 + $0x4] sm:$0xf]
    %v170 = vld [vmem:[#allocation8] sm:$0xf]
    %v171 = vld [vmem:[#allocation8 + $0x4] sm:$0xf]
    %v172 = vld [vmem:[#allocation8 + $0x8] sm:$0xf]
    %v173 = vld [vmem:[#allocation8 + $0xc] sm:$0xf]
    %v174 = vld [vmem:[#allocation8 + $0x10] sm:$0xf]
    %v175 = vld [vmem:[#allocation8 + $0x14] sm:$0xf]
    %v176 = vld [vmem:[#allocation8 + $0x18] sm:$0xf]
    %v177 = vld [vmem:[#allocation8 + $0x1c] sm:$0xf]
    %v178 = vld [vmem:[#allocation8 + $0x20] sm:$0xf]
    %v179 = vld [vmem:[#allocation8 + $0x24] sm:$0xf]
    %v180 = vld [vmem:[#allocation8 + $0x28] sm:$0xf]
    %v181 = vld [vmem:[#allocation8 + $0x2c] sm:$0xf]
    %v182 = vld [vmem:[#allocation8 + $0x30] sm:$0xf]
    %v183 = vld [vmem:[#allocation8 + $0x34] sm:$0xf]
    %v184 = vld [vmem:[#allocation8 + $0x38] sm:$0xf]
    %v185 = vld [vmem:[#allocation8 + $0x3c] sm:$0xf]
    %v186 = vld [vmem:[%s4] sm:$0x1]
    %v188 = vperm.slane %v186, 0
    %v192 = vunpack.c.l.b16 %v168
    %v193 = vunpack.c.l.b16 %v169
    %v194 = vpack.c.b16 %v193, %v192
    %v212 = vunpack.c.l.b16 %v170
    %v213 = vunpack.c.l.b16 %v171
    %v214 = vunpack.c.l.b16 %v172
    %v215 = vunpack.c.l.b16 %v173
    %v216 = vunpack.c.l.b16 %v174
    %v217 = vunpack.c.l.b16 %v175
    %v218 = vunpack.c.l.b16 %v176
    %v219 = vunpack.c.l.b16 %v177
    %v220 = vunpack.c.l.b16 %v178
    %v221 = vunpack.c.l.b16 %v179
    %v222 = vunpack.c.l.b16 %v180
    %v223 = vunpack.c.l.b16 %v181
    %v224 = vunpack.c.l.b16 %v182
    %v225 = vunpack.c.l.b16 %v183
    %v226 = vunpack.c.l.b16 %v184
    %v227 = vunpack.c.l.b16 %v185
    %v228 = vpack.c.b16 %v213, %v212
    %v229 = vpack.c.b16 %v215, %v214
    %v230 = vpack.c.b16 %v217, %v216
    %v231 = vpack.c.b16 %v219, %v218
    %v232 = vpack.c.b16 %v221, %v220
    %v233 = vpack.c.b16 %v223, %v222
    %v234 = vpack.c.b16 %v225, %v224
    %v235 = vpack.c.b16 %v227, %v226
    %244 = vmatpush.bf16.msra.mxu0 %v235
    %245 = vmatpush.bf16.msra.mxu0 %v234
    %246 = vmatpush.bf16.msra.mxu0 %v233
    %247 = vmatpush.bf16.msra.mxu0 %v232
    %248 = vmatpush.bf16.msra.mxu0 %v231
    %249 = vmatpush.bf16.msra.mxu0 %v230
    %250 = vmatpush.bf16.msra.mxu0 %v229
    %251 = vmatpush.bf16.msra.mxu0 %v228
    %252 = vmatmul.bf16.gmra.mxu0 %v194
    %v253 = vpop.f32.mrf.mxu0
    %v254 = vadd.f32 %v188, %v253
    %v255 = vpop.f32.mrf.mxu0
    %v256 = vadd.f32 %v188, %v255
    %257 = vdwg.mxu0
    %v258 = vmax.f32 %v254, 0.0
    %v259 = vmax.f32 %v256, 0.0
    %260 = vst [vmem:[#allocation9] sm:$0xff] %v258
    %261 = vst [vmem:[#allocation9 + $0x8] sm:$0xff] %v259
    // Predicated region
    $region38: #{tpu_custom_call.1} parent=1 // pred_check
      _
    $region39: #{tpu_custom_call.1} parent=1 // pred_check_branch
      %263 = sbr.rel (0) target = $region41
    $region40: #{tpu_custom_call.1} parent=1 // pred_region
      %265 = vsyncadd [#allocation5], 0
      %s266 = sshll.u32 [#allocation9], 4
      %s267 = int_to_ptr.vmem [resolvable:$true] %s266
      %s268 = sshll.u32 %s5, 4
      %s269 = int_to_ptr.hbm [resolvable:$true] %s268
      %274 = dma.vmem_to_hbm [thread:$0]  %s267, 256, %s269, [#allocation5], 128, 128, 8
    $region41: #{tpu_custom_call.1} parent=1 // pred_fallthru
      _
    // Predicated region
    $region42: #{tpu_custom_call.1} parent=1 // pred_check
      _
    $region43: #{tpu_custom_call.1} parent=1 // pred_check_branch
      %276 = sbr.rel (0) target = $region45
    $region44: #{tpu_custom_call.1} parent=1 // pred_region
      %278 = dma.done [#allocation5], 256
    $region45: #{tpu_custom_call.1} parent=1 // pred_fallthru
      _
    %279 = vsyncpa [#allocation4], 1
    %280 = vsyncpa [#allocation7], 1
    %281 = vsyncpa [#allocation5], 1

</llo_original>
